<compile_context>
chip_gen: v7x
topology: tpu7x:2x2x1
jax: 0.10.0
libtpu: 0.0.40
codegen_flags: <defaults>
</compile_context>

<pallas_src>
import functools
import math

import jax
import jax.numpy as jnp
from jax.experimental import pallas as pl
from jax.experimental.pallas import tpu as pltpu


def _round_up(x: int, m: int) -> int:
    return ((x + m - 1) // m) * m


def _pe_kernel(row_ref, b_ref, o_ref, *, rows_per_block: int):
    """Compute one (rows_per_block, lane_width) block of the PE table.

    row_ref: (rows_per_block, lane_width) f32 = r*fold*div + off*div - phase (resident).
    b_ref:   (1, lane_width) f32 = fold*div per lane (resident).
    Per grid step only the scalar-row term base*b changes; the per-vreg work is a
    single add feeding the EUP cos.
    """
    i = pl.program_id(0)
    base = (i * rows_per_block).astype(jnp.float32)   # global (folded) row offset
    step = base * b_ref[...]                          # (1, lane_width)
    o_ref[...] = jnp.cos(row_ref[...] + step)


def _lane_terms(d_model: int, lane_width: int, fold: int, rows_per_block: int):
    """Per-lane / per-tile constant terms computed once in the wrapper."""
    lanes = jnp.arange(lane_width, dtype=jnp.int32)
    col = lanes % d_model                                  # feature index within d_model
    off = (lanes // d_model).astype(jnp.float32)           # folded-position offset per lane
    pair = (col - (col % 2)).astype(jnp.float32)           # 2*(j//2)
    div = jnp.exp(pair * jnp.float32(-(math.log(10000.0) / d_model)))
    phase = jnp.where(col % 2 == 0,                        # cos(a - pi/2) == sin(a)
                      jnp.float32(math.pi / 2.0),
                      jnp.float32(0.0))
    b = (jnp.float32(fold) * div)[None, :]                 # (1, L) per-row angle increment
    r = jnp.arange(rows_per_block, dtype=jnp.float32)[:, None]
    row_term = r * b + (off * div - phase)[None, :]        # (rows_per_block, L)
    return row_term, b


@functools.lru_cache(maxsize=None)
def _build_pe_table(seq_len: int, d_model: int) -> jax.Array:
    """(1, seq_len, d_model) f32 sinusoidal table; memoized -> built once per shape."""
    # Lane-dense folding: pack `fold` consecutive positions into one lane row so the
    # output last dim is a multiple of 128 (unmasked, full-width stores).
    fold = math.lcm(d_model, 128) // d_model
    if seq_len % fold != 0:
        fold = 1
    lane_width = d_model * fold
    total_rows = seq_len // fold

    # rows_per_block: multiple of 8, <= total_rows, <= ~4 MiB of output per buffer, and
    # small enough that the grid has >=4 steps when possible (v7x megacore sharding).
    target_bytes = 4 * 1024 * 1024
    if total_rows < 8:
        rows_per_block = total_rows                        # block == full array dim
    else:
        cap_rows = max(8, (target_bytes // (lane_width * 4)) // 8 * 8)
        rows_per_block = min(cap_rows, (total_rows // 8) * 8)
        if total_rows >= 16:
            split_rows = _round_up(pl.cdiv(total_rows, 4), 8)
            rows_per_block = min(rows_per_block, split_rows)
        rows_per_block = max(8, rows_per_block)
    grid = (pl.cdiv(total_rows, rows_per_block),)

    row_term, b = _lane_terms(d_model, lane_width, fold, rows_per_block)

    pe = pl.pallas_call(
        functools.partial(_pe_kernel, rows_per_block=rows_per_block),
        out_shape=jax.ShapeDtypeStruct((total_rows, lane_width), jnp.float32),
        grid_spec=pltpu.PrefetchScalarGridSpec(
            num_scalar_prefetch=0,
            grid=grid,
            in_specs=[
                # Same block every step -> DMA'd once, stays resident in VMEM.
                pl.BlockSpec((rows_per_block, lane_width), lambda i: (0, 0)),
                pl.BlockSpec((1, lane_width), lambda i: (0, 0)),
            ],
            out_specs=pl.BlockSpec((rows_per_block, lane_width), lambda i: (i, 0)),
        ),
        compiler_params=pltpu.CompilerParams(
            dimension_semantics=("parallel",),
            vmem_limit_bytes=32 * 1024 * 1024,
        ),
    )(row_term, b)

    if fold != 1:
        pe = pe.reshape(seq_len, d_model)
    return pe[None, :, :]                                   # (1, seq_len, d_model)


def positional_embedding(x: jax.Array, d_model: int) -> jax.Array:
    """Equivalent of PositionalEmbedding(d_model)(x): returns pe[:, :x.shape[1]]."""
    return _build_pe_table(int(x.shape[1]), d_model)


def positional_embedding_ref(seq_len: int, d_model: int) -> jnp.ndarray:
    """Pure-JAX reference mirroring the PyTorch buffer construction."""
    position = jnp.arange(seq_len, dtype=jnp.float32)[:, None]
    div_term = jnp.exp(
        jnp.arange(0, d_model, 2, dtype=jnp.float32)
        * -(math.log(10000.0) / d_model)
    )
    pe = jnp.zeros((seq_len, d_model), jnp.float32)
    pe = pe.at[:, 0::2].set(jnp.sin(position * div_term))
    pe = pe.at[:, 1::2].set(jnp.cos(position * div_term))
    return pe[None]


if __name__ == "__main__":
    d_model = 32
    batch, seq_len = 2, 8

    key = jax.random.PRNGKey(0)
    x = jax.random.normal(key, (batch, seq_len, d_model), dtype=jnp.float32)

    out = positional_embedding(x, d_model)
    out = jax.block_until_ready(out)

    ref = positional_embedding_ref(seq_len, d_model)
    assert out.shape == (1, seq_len, d_model), out.shape
    assert jnp.allclose(out, ref, atol=2e-5, rtol=0.0)

    # Secondary check: exercises a multi-step grid and a ragged (clipped) last block.
    seq_len2 = 40
    x2 = jax.random.normal(key, (batch, seq_len2, d_model), dtype=jnp.float32)
    out2 = jax.block_until_ready(positional_embedding(x2, d_model))
    ref2 = positional_embedding_ref(seq_len2, d_model)
    assert out2.shape == (1, seq_len2, d_model), out2.shape
    assert jnp.allclose(out2, ref2, atol=2e-5, rtol=0.0)

    print("KERNEL_OK")
</pallas_src>

<mosaic_0001>
module attributes {stable_mosaic.version = 11 : i64} {
  func.func @_pe_kernel(%arg0: i32, %arg1: memref<2x128xf32, #tpu.memory_space<vmem>>, %arg2: memref<1x128xf32, #tpu.memory_space<vmem>>, %arg3: memref<2x128xf32, #tpu.memory_space<vmem>>) attributes {dimension_semantics = [#tpu.dimension_semantics<parallel>], iteration_bounds = array<i64: 1>, scalar_prefetch = 0 : i64, scratch_operands = 0 : i64, tpu.core_type = #tpu.core_type<tc>, window_params = [{pipeline_mode = #tpu.pipeline_mode<synchronous>, transform_indices = @transform_0, window_bounds = array<i64: 2, 128>}, {pipeline_mode = #tpu.pipeline_mode<synchronous>, transform_indices = @transform_1, window_bounds = array<i64: 1, 128>}, {transform_indices = @transform_2, window_bounds = array<i64: 2, 128>}]} {
    %c2_i32 = arith.constant 2 : i32
    %0 = arith.muli %arg0, %c2_i32 : i32
    %1 = arith.sitofp %0 : i32 to f32
    %c0 = arith.constant 0 : index
    %c0_0 = arith.constant 0 : index
    %2 = vector.load %arg2[%c0, %c0_0] : memref<1x128xf32, #tpu.memory_space<vmem>>, vector<1x128xf32>
    %3 = vector.broadcast %1 : f32 to vector<1x128xf32>
    %4 = arith.mulf %3, %2 : vector<1x128xf32>
    %c0_1 = arith.constant 0 : index
    %c0_2 = arith.constant 0 : index
    %5 = vector.load %arg1[%c0_1, %c0_2] : memref<2x128xf32, #tpu.memory_space<vmem>>, vector<2x128xf32>
    %6 = vector.broadcast %4 : vector<1x128xf32> to vector<2x128xf32>
    %7 = arith.addf %5, %6 : vector<2x128xf32>
    %8 = math.cos %7 : vector<2x128xf32>
    %c0_3 = arith.constant 0 : index
    %c0_4 = arith.constant 0 : index
    %9 = vector.load %arg3[%c0_3, %c0_4] : memref<2x128xf32, #tpu.memory_space<vmem>>, vector<2x128xf32>
    tpu.vector_store %arg3[%c0_3, %c0_4], %8 {strides = array<i32>} : memref<2x128xf32, #tpu.memory_space<vmem>>, vector<2x128xf32>,
    return
  }
  func.func @transform_0(%arg0: i32) -> (i32, i32) {
    %c0_i32 = arith.constant 0 : i32
    %c0_i32_0 = arith.constant 0 : i32
    %c0_i32_1 = arith.constant 0 : i32
    return %c0_i32, %c0_i32_0 : i32, i32
  }
  func.func @transform_1(%arg0: i32) -> (i32, i32) {
    %c0_i32 = arith.constant 0 : i32
    %c0_i32_0 = arith.constant 0 : i32
    %c0_i32_1 = arith.constant 0 : i32
    return %c0_i32, %c0_i32_0 : i32, i32
  }
  func.func @transform_2(%arg0: i32) -> (i32, i32) {
    %c0_i32 = arith.constant 0 : i32
    %c0_i32_0 = arith.constant 0 : i32
    return %arg0, %c0_i32 : i32, i32
  }
}

</mosaic_0001>

<llo_original>
// kernel: tpu_custom_call.1
$region0: #{tpu_custom_call.1}
  #allocation0 [shape = 'u32[]', space=smem, size = 0x4, offset = 0x4, fixed_abs, tag = 'smem constant byte address 0x4 - core index']
  #allocation1 [shape = 'u32[144,128]{1,0:T(1,128)}', space=vmem, size = 0x12000, scoped, tag = 'internal scratch']
  %s0 = inlined_call_operand.hbm [shape: f32[2,128], index: 0, kind: input, shape index: {}]
  %s1 = inlined_call_operand.vmem [shape: f32[1,128], index: 1, kind: input, shape index: {}]
  %s2 = inlined_call_operand.hbm [shape: f32[2,128], index: 2, kind: output, shape index: {}]
  %s3 = sld [smem:[#allocation0]]
  $region22: #{tpu_custom_call.1} parent=0
    _
  %s5 = ssub.s32 1, %s3
  %s6 = scalar_select 0, %s5, %s3
  $region1: #{tpu_custom_call.1} parent=0
    #allocation2 [shape = 'u8[1024]{0}', space=vmem, size = 0x400, scoped, tag = 'input window, operand 0, single buffered']
    #allocation3 [shape = 's32[1]{0}', space=sflag, size = 0x4, scoped, tag = 'scoped memory for tpu_custom_call.1']
    #allocation4 [shape = 's32[1]{0}', space=sflag, size = 0x4, scoped, tag = 'scoped memory for tpu_custom_call.1']
    #allocation5 [shape = 'u8[1024]{0}', space=vmem, size = 0x400, scoped, tag = 'output window, operand 0, single buffered']
    %7 = vsyncpa [#allocation3], 0
    %8 = vsyncpa [#allocation4], 0
    // Predicated region
    $region2: #{tpu_custom_call.1} parent=1 // pred_check
      _
    $region3: #{tpu_custom_call.1} parent=1 // pred_check_branch
      %10 = sbr.rel (0) target = $region5
    $region4: #{tpu_custom_call.1} parent=1 // pred_region
      %s12 = ssub.s32 32, 32
      %13 = vsyncadd [#allocation3], %s12
      %s15 = sshll.u32 [#allocation2], 4
      %s16 = int_to_ptr.vmem [resolvable:$true] %s15
      %18 = dma.hbm_to_vmem [thread:$0]  %s0, 32, %s16, [#allocation3]
    $region5: #{tpu_custom_call.1} parent=1 // pred_fallthru
      _
    // Predicated region
    $region6: #{tpu_custom_call.1} parent=1 // pred_check
      _
    $region7: #{tpu_custom_call.1} parent=1 // pred_check_branch
      %20 = sbr.rel (0) target = $region9
    $region8: #{tpu_custom_call.1} parent=1 // pred_region
      _
    $region9: #{tpu_custom_call.1} parent=1 // pred_fallthru
      _
    // Predicated region
    $region10: #{tpu_custom_call.1} parent=1 // pred_check
      _
    $region11: #{tpu_custom_call.1} parent=1 // pred_check_branch
      %22 = sbr.rel (0) target = $region13
    $region12: #{tpu_custom_call.1} parent=1 // pred_region
      %23 = dma.done [#allocation3], 32
    $region13: #{tpu_custom_call.1} parent=1 // pred_fallthru
      _
    %s24 = smul.u32 0, 2
    %s25 = scvt.s32.f32 %s24
    %v26 = vld [vmem:[%s1] sm:$0x1]
    %v27 = vstv %s25
    %v28 = vmul.f32 %v27, %v26
    %v29 = vld [vmem:[#allocation2] sm:$0x3]
    %v31 = vlaneseq
    %v32 = vshrl.u32 %v31, 7
    %v33 = vsub.s32 0, %v32
    %v34 = vrot.slane %v28, %v33
    %v36 = vadd.f32 %v29, %v34
    %v37 = vand.u32 2147483647, %v36
    %vm38 = vcmp.le.f32.partialorder %v37, 0.7853982
    %vm39 = vcmp.lt.s32.totalorder %v36, 0
    %v40 = vand.u32 %v36, 2139095040
    %v41 = vshrl.u32 %v40, 23
    %v42 = vsub.s32 %v41, 127
    %v43 = vand.u32 2147483647, %v36
    %v44 = vand.u32 %v43, 8388607
    %v45 = vor.u32 %v44, 8388608
    %v46 = vsub.s32 0, %v45
    %v47 = vadd.s32 %v42, 1
    %vm48 = vcmp.gt.s32.totalorder %v47, 0
    %v49 = vsel %vm48, %v47, 0
    %v50 = vshrl.u32 %v49, 5
    %v51 = vand.u32 %v49, 31
    %v52 = vsub.s32 32, %v51
    %v53 = vshrl.u32 683565275, %v52
    %v54 = vshll.u32 683565275, %v51
    %v55 = vshrl.u32 2475754826, %v52
    %v56 = vor.u32 %v54, %v55
    %v57 = vshll.u32 2475754826, %v51
    %v58 = vshrl.u32 2131351028, %v52
    %v59 = vor.u32 %v57, %v58
    %v60 = vshll.u32 2131351028, %v51
    %v61 = vshrl.u32 2102212464, %v52
    %v62 = vor.u32 %v60, %v61
    %v63 = vshll.u32 2102212464, %v51
    %v64 = vshrl.u32 920167782, %v52
    %v65 = vor.u32 %v63, %v64
    %v66 = vshll.u32 920167782, %v51
    %v67 = vshrl.u32 1326507024, %v52
    %v68 = vor.u32 %v66, %v67
    %vm69 = vcmp.lt.s32.totalorder %v50, 1
    %vm70 = vcmp.lt.s32.totalorder %v50, 2
    %vm71 = vcmp.lt.s32.totalorder %v50, 3
    %vm72 = vcmp.lt.s32.totalorder %v50, 4
    %v73 = vsel %vm69, %v53, %v56
    %v74 = vsel %vm72, %v62, 2102212464
    %v75 = vsel %vm71, %v59, %v74
    %v76 = vsel %vm70, %v73, %v75
    %v77 = vsel %vm69, %v56, %v59
    %v78 = vsel %vm72, %v65, 920167782
    %v79 = vsel %vm71, %v62, %v78
    %v80 = vsel %vm70, %v77, %v79
    %v81 = vsel %vm69, %v59, %v62
    %v82 = vsel %vm72, %v68, 1326507024
    %v83 = vsel %vm71, %v65, %v82
    %v84 = vsel %vm70, %v81, %v83
    %v85 = vshll.u32 %v45, 8
    %v86 = vmul.u32.u64.compose %v85, %v84
    %v87 = vextract.low.u32 %v86
    %v88 = vextract.high.u32 %v86
    %v89 = vmul.u32.u64.compose %v85, %v80
    %v90 = vextract.low.u32 %v89
    %v91 = vextract.high.u32 %v89
    %v92 = vmul.u32 %v85, %v76
    %v93 = vadd.s32 %v88, %v90
    %vm94 = vc.u32 %v88, %v90
    %v95 = vadd.s32 %v91, 1
    %v96 = vsel %vm94, %v95, %v91
    %v97 = vadd.s32 %v92, %v96
    %v98 = vadd.s32 %v97, 536870912
    %v99 = vshrl.u32 %v98, 30
    %v100 = vshll.u32 %v99, 30
    %v101 = vsub.s32 %v97, %v100
    %vm102 = vcmp.lt.s32.totalorder %v101, 0
    %v103 = vsub.s32 0, %v101
    %v104 = vsel %vm102, %v103, %v101
    %v105 = vclz %v104
    %v106 = vsub.s32 %v105, 2
    %vm107 = vcmp.gt.s32.totalorder 0, %v106
    %v108 = vsel %vm107, 0, %v106
    %v109 = vsub.s32 32, %v108
    %v110 = vshll.u32 %v101, %v108
    %v111 = vshrl.u32 %v93, %v109
    %v112 = vor.u32 %v110, %v111
    %v113 = vsub.s32 4294967266, %v108
    %v114 = vadd.s32 %v113, 127
    %v115 = vshll.u32 %v114, 23
    %v116 = vor.u32 4788187, %v115
    %v117 = vand.u32 2147483647, %v116
    %v119 = vcvt.s32.f32 %v112
    %v120 = vmul.f32 %v119, %v117
    %v121 = vxor.u32 %v120, 2147483648
    %v122 = vsel %vm39, %v121, %v120
    %v123 = vsub.s32 4, %v99
    %v124 = vsel %vm39, %v123, %v99
    %v125 = vsel %vm38, %v36, %v122
    %v126 = vsel %vm38, 0, %v124
    %v127 = vcosq.f32.pop %v125
    %v128 = vsinq.f32.pop %v125
    %vm129 = vweird.f32 %v36
    %v130 = vand.u32 %v126, 3
    %vm131 = vcmp.lt.s32.totalorder %v130, 2
    %vm132 = vcmp.eq.s32.totalorder %v130, 0
    %v133 = vxor.u32 %v128, 2147483648
    %v134 = vsel %vm132, %v127, %v133
    %vm135 = vcmp.eq.s32.totalorder %v130, 2
    %v136 = vxor.u32 %v127, 2147483648
    %v137 = vsel %vm135, %v136, %v128
    %v138 = vsel %vm131, %v134, %v137
    %v139 = vsel %vm129, nan, %v138
    %140 = vst [vmem:[#allocation5] sm:$0x3] %v139
    // Predicated region
    $region14: #{tpu_custom_call.1} parent=1 // pred_check
      _
    $region15: #{tpu_custom_call.1} parent=1 // pred_check_branch
      %142 = sbr.rel (0) target = $region17
    $region16: #{tpu_custom_call.1} parent=1 // pred_region
      %s144 = ssub.s32 32, 32
      %145 = vsyncadd [#allocation4], %s144
      %s147 = sshll.u32 [#allocation5], 4
      %s148 = int_to_ptr.vmem [resolvable:$true] %s147
      %150 = dma.vmem_to_hbm [thread:$0]  %s148, 32, %s2, [#allocation4]
    $region17: #{tpu_custom_call.1} parent=1 // pred_fallthru
      _
    // Predicated region
    $region18: #{tpu_custom_call.1} parent=1 // pred_check
      _
    $region19: #{tpu_custom_call.1} parent=1 // pred_check_branch
      %152 = sbr.rel (0) target = $region21
    $region20: #{tpu_custom_call.1} parent=1 // pred_region
      %153 = dma.done [#allocation4], 32
    $region21: #{tpu_custom_call.1} parent=1 // pred_fallthru
      _
    %154 = vsyncpa [#allocation3], 1
    %155 = vsyncpa [#allocation4], 1

</llo_original>
